<compile_context>
chip_gen: v6e
topology: v6e:2x2x1
jax: 0.10.0
libtpu: 0.0.40
codegen_flags: <defaults>
</compile_context>

<pallas_src>
import functools

import jax
import jax.numpy as jnp
from jax import lax
from jax.experimental import pallas as pl
from jax.experimental.pallas import tpu as pltpu


def _triplet_rowblock_kernel(x_ref, sq_row_ref, lbl_row_ref, sq_col_ref,
                             lbl_col_ref, out_ref, *, margin, tb,
                             lane_major_out):
    """One anchor-row tile vs. the full (VMEM-resident) batch."""
    i = pl.program_id(0)
    row0 = pl.multiple_of(i * tb, tb)

    xj = x_ref[...]                          # (B, D) resident block (fetched once)
    xi = x_ref[pl.ds(row0, tb), :]           # (tb, D) anchors sliced from it

    # Gram matrix on the MXU, contracting the feature dim of BOTH operands
    # directly (no transpose), f32 accumulation.  (If accuracy permits, casting
    # f32 features to bf16 here gives ~3x MXU throughput on v6e/v7x; kept exact
    # to match the torch reference.)
    gram = lax.dot_general(
        xi, xj,
        dimension_numbers=(((1,), (1,)), ((), ())),
        preferred_element_type=jnp.float32,
    )                                                        # (tb, B)

    xi_sq = sq_col_ref[...]                  # (tb, 1) f32, precomputed in wrapper
    xj_sq = sq_row_ref[...]                  # (1,  B) f32, precomputed in wrapper

    # clamp(min=1e-12) on squared distances; sqrt deferred past the reductions
    # (both monotone => identical selection and values).
    dist2 = jnp.maximum(xi_sq + xj_sq - 2.0 * gram, 1e-12)   # (tb, B)

    # same[i, j] = (label_i == label_j); diagonal (self) True, as in torch.
    same = lbl_col_ref[...] == lbl_row_ref[...]              # (tb, B)

    ap2 = jnp.max(jnp.where(same, dist2, -jnp.inf), axis=1, keepdims=True)
    an2 = jnp.min(jnp.where(same, jnp.inf, dist2), axis=1, keepdims=True)
    # A row with no in-batch negative yields an2 = +inf and contributes 0 below
    # (the PyTorch reference would raise on an empty min()).

    hinge = jnp.maximum(jnp.sqrt(ap2) - jnp.sqrt(an2) + margin, 0.0)  # (tb, 1)

    if lane_major_out:
        # Lane-dense (1, tb) store; the tiny (tb,1)->(1,tb) relayout rides the
        # otherwise-idle XLU.
        out_ref[...] = hinge.reshape(1, tb)
    else:
        out_ref[...] = hinge


def _tpu_generation():
    try:
        kind = jax.devices()[0].device_kind.lower()
    except Exception:
        return 0
    for g in (7, 6, 5, 4, 3, 2):
        if "v%d" % g in kind:
            return g
    return 0


# Scoped-VMEM limit per generation (None -> leave compiler default).
_VMEM_LIMIT = {
    7: 48 * 1024 * 1024,    # 64 MiB physical: leave pipeline headroom
    6: 96 * 1024 * 1024,    # 128 MiB physical
    5: 96 * 1024 * 1024,    # 128 MiB physical
    4: 96 * 1024 * 1024,
}


def _pick_row_tile(batch, feat_dim, itemsize, gen):
    """Largest aligned anchor tile whose intermediates fit the VMEM budget."""
    if gen >= 7:
        budget = 40 * 1024 * 1024
        base = (256, 128, 64, 32, 16, 8)
        prefer_multi_step = True          # "parallel" axis shards across 2 TCs
    elif gen == 6:
        budget = 80 * 1024 * 1024
        base = (256, 128, 64, 32, 16, 8)
        prefer_multi_step = False         # single TC: grid is a serial loop
    elif gen == 5:
        budget = 80 * 1024 * 1024
        base = (128, 64, 32, 16, 8)       # 4x(128x128) MXUs
        prefer_multi_step = False
    else:
        budget = 24 * 1024 * 1024
        base = (128, 64, 32, 16, 8)
        prefer_multi_step = False

    # Respect sublane packing: bf16 -> >=16 rows, int8/fp8 -> >=32 rows.
    min_tile = {4: 8, 2: 16, 1: 32}.get(int(itemsize), 8)
    candidates = tuple(t for t in base if t >= min_tile)

    def fits(tb):
        resident = 2 * batch * feat_dim * itemsize   # (B, D) block (2 buffers)
        interm = 3 * tb * batch * 4                  # gram / dist2 / masked f32
        small = 8 * batch * 4                        # norms, labels, output
        return resident + interm + small < budget

    if prefer_multi_step:
        for tb in candidates:
            if batch % tb == 0 and batch // tb >= 2 and fits(tb):
                return tb
    for tb in candidates:
        if batch % tb == 0 and fits(tb):
            return tb
    # Small / odd batch (or nothing fits): single full-extent block.
    return batch


def triplet_loss(inputs, targets, margin=0.3):
    """inputs: (B, D) float features, targets: (B,) int labels -> scalar f32."""
    B, D = inputs.shape

    # Pad the feature dim to a lane multiple; zero padding changes neither the
    # Gram matrix nor the row norms.
    d_pad = ((D + 127) // 128) * 128
    if d_pad != D:
        inputs = jnp.pad(inputs, ((0, 0), (0, d_pad - D)))
        D = d_pad

    gen = _tpu_generation()
    tb = _pick_row_tile(B, D, inputs.dtype.itemsize, gen)
    grid = (B // tb,)

    # Loop-invariant row norms, computed ONCE outside the kernel.
    sq = jnp.sum(inputs.astype(jnp.float32) * inputs.astype(jnp.float32), axis=1)
    sq_col = sq.reshape(B, 1)
    sq_row = sq.reshape(1, B)
    labels = targets.astype(jnp.int32)
    lbl_col = labels.reshape(B, 1)
    lbl_row = labels.reshape(1, B)

    lane_major_out = (tb % 128 == 0)
    if lane_major_out:
        out_shape = jax.ShapeDtypeStruct((1, B), jnp.float32)
        out_spec = pl.BlockSpec((1, tb), lambda i: (0, i))
    else:
        out_shape = jax.ShapeDtypeStruct((B, 1), jnp.float32)
        out_spec = pl.BlockSpec((tb, 1), lambda i: (i, 0))

    kernel = functools.partial(
        _triplet_rowblock_kernel,
        margin=float(margin), tb=tb, lane_major_out=lane_major_out)

    cp_kwargs = dict(dimension_semantics=("parallel",))
    vmem_limit = _VMEM_LIMIT.get(gen)
    if vmem_limit is not None:
        cp_kwargs["vmem_limit_bytes"] = vmem_limit

    hinge = pl.pallas_call(
        kernel,
        out_shape=out_shape,
        grid_spec=pl.GridSpec(
            grid=grid,
            in_specs=[
                pl.BlockSpec((B, D), lambda i: (0, 0)),   # full batch, resident (one DMA)
                pl.BlockSpec((1, B), lambda i: (0, 0)),   # ||x_j||^2, lane-major, resident
                pl.BlockSpec((1, B), lambda i: (0, 0)),   # labels, lane-major, resident
                pl.BlockSpec((tb, 1), lambda i: (i, 0)),  # anchor ||x_i||^2 tile
                pl.BlockSpec((tb, 1), lambda i: (i, 0)),  # anchor labels tile
            ],
            out_specs=out_spec,
        ),
        compiler_params=pltpu.CompilerParams(**cp_kwargs),
    )(inputs, sq_row, lbl_row, sq_col, lbl_col)

    # Final mean over B per-anchor hinge values (tiny; done outside so the
    # anchor grid axis stays "parallel").
    return jnp.mean(hinge)


if __name__ == "__main__":
    batch = 8
    feat_dim = 128
    margin = 0.3

    key = jax.random.PRNGKey(0)
    x = jax.random.normal(key, (batch, feat_dim), dtype=jnp.float32)
    # PK-style labels: every anchor has at least one positive and one negative.
    labels = jnp.array([0, 0, 1, 1, 2, 2, 3, 3], dtype=jnp.int32)

    loss = triplet_loss(x, labels, margin=margin)
    jax.block_until_ready(loss)

    # Pure-JAX reference with identical semantics.
    gram = lax.dot_general(
        x, x, dimension_numbers=(((1,), (1,)), ((), ())),
        precision=lax.Precision.HIGHEST)
    xsq = jnp.sum(x * x, axis=1, keepdims=True)
    dist = jnp.sqrt(jnp.maximum(xsq + xsq.T - 2.0 * gram, 1e-12))
    mask = labels[:, None] == labels[None, :]
    dist_ap = jnp.max(jnp.where(mask, dist, -jnp.inf), axis=1)
    dist_an = jnp.min(jnp.where(mask, jnp.inf, dist), axis=1)
    ref = jnp.mean(jnp.maximum(dist_ap - dist_an + margin, 0.0))

    assert jnp.allclose(loss, ref, rtol=1e-2, atol=1e-2), (loss, ref)

    print("KERNEL_OK")
</pallas_src>

<mosaic_0001>
module attributes {stable_mosaic.version = 11 : i64} {
  func.func @_triplet_rowblock_kernel(%arg0: i32, %arg1: memref<8x128xf32, #tpu.memory_space<vmem>>, %arg2: memref<1x8xf32, #tpu.memory_space<vmem>>, %arg3: memref<1x8xi32, #tpu.memory_space<vmem>>, %arg4: memref<8x1xf32, #tpu.memory_space<vmem>>, %arg5: memref<8x1xi32, #tpu.memory_space<vmem>>, %arg6: memref<8x1xf32, #tpu.memory_space<vmem>>) attributes {dimension_semantics = [#tpu.dimension_semantics<parallel>], iteration_bounds = array<i64: 1>, scalar_prefetch = 0 : i64, scratch_operands = 0 : i64, tpu.core_type = #tpu.core_type<tc>, window_params = [{pipeline_mode = #tpu.pipeline_mode<synchronous>, transform_indices = @transform_0, window_bounds = array<i64: 8, 128>}, {pipeline_mode = #tpu.pipeline_mode<synchronous>, transform_indices = @transform_1, window_bounds = array<i64: 1, 8>}, {pipeline_mode = #tpu.pipeline_mode<synchronous>, transform_indices = @transform_2, window_bounds = array<i64: 1, 8>}, {transform_indices = @transform_3, window_bounds = array<i64: 8, 1>}, {transform_indices = @transform_4, window_bounds = array<i64: 8, 1>}, {transform_indices = @transform_5, window_bounds = array<i64: 8, 1>}]} {
    %c8_i32 = arith.constant 8 : i32
    %0 = arith.muli %arg0, %c8_i32 : i32
    %1 = tpu.assume_multiple %0, 8 : i32
    %c0 = arith.constant 0 : index
    %c0_0 = arith.constant 0 : index
    %2 = vector.load %arg1[%c0, %c0_0] : memref<8x128xf32, #tpu.memory_space<vmem>>, vector<8x128xf32>
    %3 = arith.index_cast %1 : i32 to index
    %c0_1 = arith.constant 0 : index
    %4 = vector.load %arg1[%3, %c0_1] : memref<8x128xf32, #tpu.memory_space<vmem>>, vector<8x128xf32>
    %cst = arith.constant dense<0.000000e+00> : vector<8x8xf32>
    %5 = tpu.matmul %4, %2, %cst {dimension_numbers = #tpu.dot_dimension_numbers<[1], [1], [0], [0], [0, 0, 1, 0], [], []>} : vector<8x128xf32>, vector<8x128xf32>, vector<8x8xf32> -> vector<8x8xf32>
    %c0_2 = arith.constant 0 : index
    %c0_3 = arith.constant 0 : index
    %6 = vector.load %arg4[%c0_2, %c0_3] : memref<8x1xf32, #tpu.memory_space<vmem>>, vector<8x1xf32>
    %c0_4 = arith.constant 0 : index
    %c0_5 = arith.constant 0 : index
    %7 = vector.load %arg2[%c0_4, %c0_5] : memref<1x8xf32, #tpu.memory_space<vmem>>, vector<1x8xf32>
    %8 = vector.broadcast %6 : vector<8x1xf32> to vector<8x8xf32>
    %9 = vector.broadcast %7 : vector<1x8xf32> to vector<8x8xf32>
    %10 = arith.addf %8, %9 : vector<8x8xf32>
    %cst_6 = arith.constant 2.000000e+00 : f32
    %11 = vector.broadcast %cst_6 : f32 to vector<8x8xf32>
    %12 = arith.mulf %11, %5 : vector<8x8xf32>
    %13 = arith.subf %10, %12 : vector<8x8xf32>
    %cst_7 = arith.constant 9.99999996E-13 : f32
    %14 = vector.broadcast %cst_7 : f32 to vector<8x8xf32>
    %15 = arith.maximumf %13, %14 : vector<8x8xf32>
    %c0_8 = arith.constant 0 : index
    %c0_9 = arith.constant 0 : index
    %16 = vector.load %arg5[%c0_8, %c0_9] : memref<8x1xi32, #tpu.memory_space<vmem>>, vector<8x1xi32>
    %c0_10 = arith.constant 0 : index
    %c0_11 = arith.constant 0 : index
    %17 = vector.load %arg3[%c0_10, %c0_11] : memref<1x8xi32, #tpu.memory_space<vmem>>, vector<1x8xi32>
    %18 = vector.broadcast %16 : vector<8x1xi32> to vector<8x8xi32>
    %19 = vector.broadcast %17 : vector<1x8xi32> to vector<8x8xi32>
    %20 = arith.cmpi eq, %18, %19 : vector<8x8xi32>
    %cst_12 = arith.constant 0xFF800000 : f32
    %21 = vector.broadcast %cst_12 : f32 to vector<8x8xf32>
    %22 = arith.select %20, %15, %21 : vector<8x8xi1>, vector<8x8xf32>
    %cst_13 = arith.constant dense<0xFF800000> : vector<8xf32>
    %23 = vector.multi_reduction <maximumf>, %22, %cst_13 [1] : vector<8x8xf32> to vector<8xf32>
    %24 = vector.shape_cast %23 : vector<8xf32> to vector<8x1xf32>
    %cst_14 = arith.constant 0x7F800000 : f32
    %25 = vector.broadcast %cst_14 : f32 to vector<8x8xf32>
    %26 = arith.select %20, %25, %15 : vector<8x8xi1>, vector<8x8xf32>
    %cst_15 = arith.constant dense<0x7F800000> : vector<8xf32>
    %27 = vector.multi_reduction <minimumf>, %26, %cst_15 [1] : vector<8x8xf32> to vector<8xf32>
    %28 = vector.shape_cast %27 : vector<8xf32> to vector<8x1xf32>
    %29 = math.sqrt %24 : vector<8x1xf32>
    %30 = math.sqrt %28 : vector<8x1xf32>
    %31 = arith.subf %29, %30 : vector<8x1xf32>
    %cst_16 = arith.constant 3.000000e-01 : f32
    %32 = vector.broadcast %cst_16 : f32 to vector<8x1xf32>
    %33 = arith.addf %31, %32 : vector<8x1xf32>
    %cst_17 = arith.constant 0.000000e+00 : f32
    %34 = vector.broadcast %cst_17 : f32 to vector<8x1xf32>
    %35 = arith.maximumf %33, %34 : vector<8x1xf32>
    %c0_18 = arith.constant 0 : index
    %c0_19 = arith.constant 0 : index
    %36 = vector.load %arg6[%c0_18, %c0_19] : memref<8x1xf32, #tpu.memory_space<vmem>>, vector<8x1xf32>
    tpu.vector_store %arg6[%c0_18, %c0_19], %35 {strides = array<i32>} : memref<8x1xf32, #tpu.memory_space<vmem>>, vector<8x1xf32>,
    return
  }
  func.func @transform_0(%arg0: i32) -> (i32, i32) {
    %c0_i32 = arith.constant 0 : i32
    %c0_i32_0 = arith.constant 0 : i32
    %c0_i32_1 = arith.constant 0 : i32
    return %c0_i32, %c0_i32_0 : i32, i32
  }
  func.func @transform_1(%arg0: i32) -> (i32, i32) {
    %c0_i32 = arith.constant 0 : i32
    %c0_i32_0 = arith.constant 0 : i32
    %c0_i32_1 = arith.constant 0 : i32
    return %c0_i32, %c0_i32_0 : i32, i32
  }
  func.func @transform_2(%arg0: i32) -> (i32, i32) {
    %c0_i32 = arith.constant 0 : i32
    %c0_i32_0 = arith.constant 0 : i32
    %c0_i32_1 = arith.constant 0 : i32
    return %c0_i32, %c0_i32_0 : i32, i32
  }
  func.func @transform_3(%arg0: i32) -> (i32, i32) {
    %c0_i32 = arith.constant 0 : i32
    %c0_i32_0 = arith.constant 0 : i32
    return %arg0, %c0_i32 : i32, i32
  }
  func.func @transform_4(%arg0: i32) -> (i32, i32) {
    %c0_i32 = arith.constant 0 : i32
    %c0_i32_0 = arith.constant 0 : i32
    return %arg0, %c0_i32 : i32, i32
  }
  func.func @transform_5(%arg0: i32) -> (i32, i32) {
    %c0_i32 = arith.constant 0 : i32
    %c0_i32_0 = arith.constant 0 : i32
    return %arg0, %c0_i32 : i32, i32
  }
}

</mosaic_0001>

<llo_original>
// kernel: tpu_custom_call.1
$region0: #{tpu_custom_call.1}
  #allocation0 [shape = 'u32[]', space=smem, size = 0x4, offset = 0x4, fixed_abs, tag = 'smem constant byte address 0x4 - core index']
  #allocation1 [shape = 'u32[144,128]{1,0:T(1,128)}', space=vmem, size = 0x12000, scoped, tag = 'internal scratch']
  %s0 = inlined_call_operand.vmem [shape: f32[8,128], index: 0, kind: input, shape index: {}]
  %s1 = inlined_call_operand.vmem [shape: f32[1,8], index: 1, kind: input, shape index: {}]
  %s2 = inlined_call_operand.vmem [shape: s32[1,8], index: 2, kind: input, shape index: {}]
  %s3 = inlined_call_operand.vmem [shape: f32[8,1], index: 3, kind: input, shape index: {}]
  %s4 = inlined_call_operand.vmem [shape: s32[8,1], index: 4, kind: input, shape index: {}]
  %s5 = inlined_call_operand.vmem [shape: f32[8,1], index: 5, kind: output, shape index: {}]
  %s6 = sld [smem:[#allocation0]]
  $region30: #{tpu_custom_call.1} parent=0
    _
  %s8 = ssub.s32 1, %s6
  %s9 = scalar_select 0, %s8, %s6
  // Predicated region
  $region2: #{tpu_custom_call.1} parent=0 // pred_check
    _
  $region3: #{tpu_custom_call.1} parent=0 // pred_check_branch
    %11 = sbr.rel (0) target = $region5
  $region4: #{tpu_custom_call.1} parent=0 // pred_region
    _
  $region5: #{tpu_custom_call.1} parent=0 // pred_fallthru
    _
  // Predicated region
  $region6: #{tpu_custom_call.1} parent=0 // pred_check
    _
  $region7: #{tpu_custom_call.1} parent=0 // pred_check_branch
    %13 = sbr.rel (0) target = $region9
  $region8: #{tpu_custom_call.1} parent=0 // pred_region
    _
  $region9: #{tpu_custom_call.1} parent=0 // pred_fallthru
    _
  // Predicated region
  $region10: #{tpu_custom_call.1} parent=0 // pred_check
    _
  $region11: #{tpu_custom_call.1} parent=0 // pred_check_branch
    %15 = sbr.rel (0) target = $region13
  $region12: #{tpu_custom_call.1} parent=0 // pred_region
    _
  $region13: #{tpu_custom_call.1} parent=0 // pred_fallthru
    _
  // Predicated region
  $region14: #{tpu_custom_call.1} parent=0 // pred_check
    _
  $region15: #{tpu_custom_call.1} parent=0 // pred_check_branch
    %17 = sbr.rel (0) target = $region17
  $region16: #{tpu_custom_call.1} parent=0 // pred_region
    _
  $region17: #{tpu_custom_call.1} parent=0 // pred_fallthru
    _
  // Predicated region
  $region18: #{tpu_custom_call.1} parent=0 // pred_check
    _
  $region19: #{tpu_custom_call.1} parent=0 // pred_check_branch
    %19 = sbr.rel (0) target = $region21
  $region20: #{tpu_custom_call.1} parent=0 // pred_region
    _
  $region21: #{tpu_custom_call.1} parent=0 // pred_fallthru
    _
  %s20 = smul.u32 0, 8
  %v21 = vld [vmem:[%s0] sm:$0xff]
  %s22 = scalar_lea.vmem %s0, %s20
  %v23 = vld [vmem:[%s22] sm:$0xff]
  %24 = vmatprep.subr.mxu0 0.0
  %25 = vmatpush1.xpose.msra.mxu0 0.0
  %26 = vmatprep.subr.mxu0 0.0
  %27 = vmatpush1.xpose.msra.mxu0 0.0
  %28 = vmatprep.subr.mxu0 0.0
  %29 = vmatpush1.xpose.msra.mxu0 0.0
  %30 = vmatprep.subr.mxu0 0.0
  %31 = vmatpush1.xpose.msra.mxu0 0.0
  %32 = vmatprep.subr.mxu0 0.0
  %33 = vmatpush1.xpose.msra.mxu0 0.0
  %34 = vmatprep.subr.mxu0 0.0
  %35 = vmatpush1.xpose.msra.mxu0 0.0
  %36 = vmatprep.subr.mxu0 0.0
  %37 = vmatpush1.xpose.msra.mxu0 0.0
  %38 = vmatprep.subr.mxu0 0.0
  %39 = vmatpush1.xpose.msra.mxu0 0.0
  %40 = vmatprep.subr.mxu0 0.0
  %41 = vmatpush1.xpose.msra.mxu0 0.0
  %42 = vmatprep.subr.mxu0 0.0
  %43 = vmatpush1.xpose.msra.mxu0 0.0
  %44 = vmatprep.subr.mxu0 0.0
  %45 = vmatpush1.xpose.msra.mxu0 0.0
  %46 = vmatprep.subr.mxu0 0.0
  %47 = vmatpush1.xpose.msra.mxu0 0.0
  %48 = vmatprep.subr.mxu0 0.0
  %49 = vmatpush1.xpose.msra.mxu0 0.0
  %50 = vmatprep.subr.mxu0 0.0
  %51 = vmatpush1.xpose.msra.mxu0 0.0
  %52 = vmatprep.subr.mxu0 0.0
  %53 = vmatpush1.xpose.msra.mxu0 0.0
  %54 = vmatprep.subr.mxu0 0.0
  %55 = vmatpush1.xpose.msra.mxu0 %v21
  %56 = vmatprep.subr.mxu0 0.0
  %57 = vmatpush2.xpose.msra.mxu0 0.0
  %58 = vmatprep.subr.mxu0 0.0
  %59 = vmatpush2.xpose.msra.mxu0 0.0
  %60 = vmatprep.subr.mxu0 0.0
  %61 = vmatpush2.xpose.msra.mxu0 0.0
  %62 = vmatprep.subr.mxu0 0.0
  %63 = vmatpush2.xpose.msra.mxu0 0.0
  %64 = vmatprep.subr.mxu0 0.0
  %65 = vmatpush2.xpose.msra.mxu0 0.0
  %66 = vmatprep.subr.mxu0 0.0
  %67 = vmatpush2.xpose.msra.mxu0 0.0
  %68 = vmatprep.subr.mxu0 0.0
  %69 = vmatpush2.xpose.msra.mxu0 0.0
  %70 = vmatprep.subr.mxu0 0.0
  %71 = vmatpush2.xpose.msra.mxu0 0.0
  %72 = vmatprep.subr.mxu0 0.0
  %73 = vmatpush2.xpose.msra.mxu0 0.0
  %74 = vmatprep.subr.mxu0 0.0
  %75 = vmatpush2.xpose.msra.mxu0 0.0
  %76 = vmatprep.subr.mxu0 0.0
  %77 = vmatpush2.xpose.msra.mxu0 0.0
  %78 = vmatprep.subr.mxu0 0.0
  %79 = vmatpush2.xpose.msra.mxu0 0.0
  %80 = vmatprep.subr.mxu0 0.0
  %81 = vmatpush2.xpose.msra.mxu0 0.0
  %82 = vmatprep.subr.mxu0 0.0
  %83 = vmatpush2.xpose.msra.mxu0 0.0
  %84 = vmatprep.subr.mxu0 0.0
  %85 = vmatpush2.xpose.msra.mxu0 0.0
  %86 = vmatprep.subr.mxu0 0.0
  %87 = vmatpush2.xpose.msra.mxu0 0.0
  %88 = vmatprep.mubr.f32.mxu0 0.0
  %89 = vmatmul.mubr.f32.gmra.mxu0 %v23
  %v90 = vpop.f32.mrf.mxu0
  %v91 = vadd.f32 0.0, %v90
  %v92 = vpop.f32.mrf.mxu0
  %93 = vdwg.mxu0
  %v94 = vld [vmem:[%s3] sm:$0xff]
  %v95 = vld [vmem:[%s1] sm:$0x1]
  %97 = vset.pattern.permute.xlu0 0
  %98 = vperm.xlu0 %97, %v94
  %v99 = vpop.permute.xlu0 %98
  %v102 = vlaneseq
  %v103 = vshrl.u32 %v102, 7
  %v104 = vsub.s32 0, %v103
  %v105 = vrot.slane %v95, %v104
  %v107 = vadd.f32 %v99, %v105
  %v108 = vmul.f32 %v91, 2.0
  %v109 = vsub.f32 %v107, %v108
  %v110 = vmax.f32 %v109, 1e-12
  %v111 = vld [vmem:[%s4] sm:$0xff]
  %v112 = vld [vmem:[%s2] sm:$0x1]
  %113 = vset.pattern.permute.xlu0 0
  %114 = vperm.xlu0 %113, %v111
  %v115 = vpop.permute.xlu0 %114
  %v116 = vlaneseq
  %v117 = vshrl.u32 %v116, 7
  %v118 = vsub.s32 0, %v117
  %v119 = vrot.slane %v112, %v118
  %vm120 = vcmp.eq.s32.totalorder %v115, %v119
  %v121 = vsel %vm120, %v110, -inf
  %vm122 = vcmask 64512
  %v123 = vsel %vm122, %v121, -inf
  %124 = vmax.xlane.f32.xlu0 %v123
  %v125 = vpop.xlane.xlu0 %124
  %v126 = vsel %vm120, inf, %v110
  %v127 = vsel %vm122, %v126, inf
  %128 = vmin.xlane.f32.xlu0 %v127
  %v129 = vpop.xlane.xlu0 %128
  %v130 = vrsqrt.pop %v125
  %v131 = vmul.f32 %v125, %v130
  %vm132 = vcmp.eq.f32.partialorder %v125, inf
  %v133 = vsel %vm132, %v125, %v131
  %vm134 = vcmp.eq.f32.partialorder %v125, 0.0
  %v135 = vand.u32 %v125, 2147483648
  %v136 = vsel %vm134, %v135, %v133
  %v137 = vrsqrt.pop %v129
  %v138 = vmul.f32 %v129, %v137
  %vm139 = vcmp.eq.f32.partialorder %v129, inf
  %v140 = vsel %vm139, %v129, %v138
  %vm141 = vcmp.eq.f32.partialorder %v129, 0.0
  %v142 = vand.u32 %v129, 2147483648
  %v143 = vsel %vm141, %v142, %v140
  %v144 = vsub.f32 %v136, %v143
  %v145 = vadd.f32 %v144, 0.3
  %v146 = vmax.f32 %v145, 0.0
  %vm147 = vcmask 7168
  %148 = vst.msk [vmem:[%s5] sm:$0xff] %vm147, %v146
  // Predicated region
  $region22: #{tpu_custom_call.1} parent=0 // pred_check
    _
  $region23: #{tpu_custom_call.1} parent=0 // pred_check_branch
    %150 = sbr.rel (0) target = $region25
  $region24: #{tpu_custom_call.1} parent=0 // pred_region
    _
  $region25: #{tpu_custom_call.1} parent=0 // pred_fallthru
    _
  // Predicated region
  $region26: #{tpu_custom_call.1} parent=0 // pred_check
    _
  $region27: #{tpu_custom_call.1} parent=0 // pred_check_branch
    %152 = sbr.rel (0) target = $region29
  $region28: #{tpu_custom_call.1} parent=0 // pred_region
    _
  $region29: #{tpu_custom_call.1} parent=0 // pred_fallthru
    _

</llo_original>
